<compile_context>
chip_gen: v7x
topology: tpu7x:2x2x1
jax: 0.10.0
libtpu: 0.0.40
codegen_flags: <defaults>
</compile_context>

<pallas_src>
import jax
import jax.numpy as jnp
import numpy as np
from jax.experimental import pallas as pl
from jax.experimental.pallas import tpu as pltpu

F = 128    # padded feature width (every hidden feature dim zero-padded to this)
NP = 128   # padded batch width (batch lives on the lane axis)


def mlp_kernel(x_ref, w_ref, v_ref, o_ref):
    # x_ref: (1, NP)   input, batch on lanes
    # w_ref: (3, F, F) transposed, zero-padded weights for layers 2..4
    # v_ref: (F, 8)    columns: [w1, b1, b2, b3, b4, w5, b5, pad]
    # o_ref: (1, NP)   lane-dense output row
    x_row = x_ref[...]
    w1c = v_ref[:, 0:1]
    b1c = v_ref[:, 1:2]
    b2c = v_ref[:, 2:3]
    b3c = v_ref[:, 3:4]
    b4c = v_ref[:, 4:5]
    w5c = v_ref[:, 5:6]
    b5 = v_ref[0:1, 6:7]

    # Layer 1: contraction dim is 1 -> pure VPU outer product, no MXU.
    h = jnp.maximum(w1c * x_row + b1c, 0.0)                                           # (F, NP)
    # Layers 2-4: full 128x128x128 MXU matmuls (zero padding contributes nothing).
    h = jnp.maximum(jnp.dot(w_ref[0], h, preferred_element_type=jnp.float32) + b2c, 0.0)
    h = jnp.maximum(jnp.dot(w_ref[1], h, preferred_element_type=jnp.float32) + b3c, 0.0)
    h = jnp.maximum(jnp.dot(w_ref[2], h, preferred_element_type=jnp.float32) + b4c, 0.0)
    # Layer 5: output dim is 1 -> VPU multiply + cross-sublane reduce (XLU),
    # producing a lane-dense (1, NP) row instead of an (NP, 1) masked column.
    o_ref[...] = (jnp.sum(w5c * h, axis=0, keepdims=True) + b5).astype(o_ref.dtype)


def _pad2(a, rows, cols):
    out = jnp.zeros((rows, cols), jnp.float32)
    return out.at[: a.shape[0], : a.shape[1]].set(a.astype(jnp.float32))


def _pad_col(v, rows):
    out = jnp.zeros((rows,), jnp.float32)
    return out.at[: v.size].set(v.astype(jnp.float32).reshape(-1))


def pack_params(params):
    """Pack the 10 parameter tensors into two padded, VMEM-friendly buffers (done once)."""
    w1, b1, w2, b2, w3, b3, w4, b4, w5, b5 = params
    wbuf = jnp.stack([_pad2(w2.T, F, F), _pad2(w3.T, F, F), _pad2(w4.T, F, F)])   # (3, F, F)
    vbuf = jnp.stack(
        [_pad_col(w1, F), _pad_col(b1, F), _pad_col(b2, F), _pad_col(b3, F),
         _pad_col(b4, F), _pad_col(w5, F), _pad_col(b5, F),
         jnp.zeros((F,), jnp.float32)],
        axis=1)                                                                    # (F, 8)
    return wbuf, vbuf


def mlp_forward(x, packed):
    wbuf, vbuf = packed
    n = x.shape[0]
    assert n <= NP, "single-tile kernel; add a lane-blocked batch grid for larger batches"
    # Batch on the lane axis, zero-padded to a full 128-lane row (lane-dense I/O).
    x_row = jnp.zeros((1, NP), jnp.float32).at[0, :n].set(x.reshape(-1).astype(jnp.float32))
    vmem = pl.BlockSpec(memory_space=pltpu.MemorySpace.VMEM)
    out_row = pl.pallas_call(
        mlp_kernel,
        out_shape=jax.ShapeDtypeStruct((1, NP), jnp.float32),
        in_specs=[vmem, vmem, vmem],
        out_specs=vmem,
    )(x_row, wbuf, vbuf)
    return out_row[0, :n].reshape(n, 1)


def init_params(key):
    ks = jax.random.split(key, 5)
    w1 = jax.random.normal(ks[0], (1, 20), jnp.float32)
    b1 = jnp.zeros((20,), jnp.float32)
    w2 = jax.random.normal(ks[1], (20, 64), jnp.float32)
    b2 = jnp.zeros((64,), jnp.float32)
    w3 = jax.random.normal(ks[2], (64, 128), jnp.float32)
    b3 = jnp.zeros((128,), jnp.float32)
    w4 = jax.random.normal(ks[3], (128, 64), jnp.float32)
    b4 = jnp.zeros((64,), jnp.float32)
    w5 = jax.random.normal(ks[4], (64, 1), jnp.float32)
    b5 = jnp.zeros((1,), jnp.float32)
    return (w1, b1, w2, b2, w3, b3, w4, b4, w5, b5)


def reference_forward_np(x, params):
    # Exact float64 numpy reference.  The kernel's MXU matmuls may use the
    # hardware-default bf16-operand passes, hence the relative tolerance below.
    w1, b1, w2, b2, w3, b3, w4, b4, w5, b5 = [np.asarray(t, np.float64) for t in params]
    h = np.asarray(x, np.float64)
    h = np.maximum(h @ w1 + b1, 0.0)
    h = np.maximum(h @ w2 + b2, 0.0)
    h = np.maximum(h @ w3 + b3, 0.0)
    h = np.maximum(h @ w4 + b4, 0.0)
    return h @ w5 + b5


if __name__ == "__main__":
    key = jax.random.PRNGKey(0)
    params = init_params(key)
    packed = pack_params(params)

    # Matches the module's example input: torch.arange(-10, 10).unsqueeze(1) -> (20, 1)
    x = jnp.arange(-10, 10, dtype=jnp.float32).reshape(20, 1)

    out = jax.block_until_ready(mlp_forward(x, packed))
    assert out.shape == (20, 1), out.shape

    ref = reference_forward_np(np.asarray(x), params)
    scale = max(1.0, float(np.max(np.abs(ref))))
    # 2e-2 relative-of-max absorbs possible bf16-operand MXU passes while still
    # catching any wiring error (wrong transpose / missing ReLU would be O(1) off).
    assert np.max(np.abs(np.asarray(out, np.float64) - ref)) <= 2e-2 * scale, \
        "mismatch vs reference"

    print("KERNEL_OK")
</pallas_src>

<mosaic_0001>
module attributes {stable_mosaic.version = 11 : i64} {
  func.func @mlp_kernel(%arg0: memref<1x128xf32, #tpu.memory_space<vmem>>, %arg1: memref<3x128x128xf32, #tpu.memory_space<vmem>>, %arg2: memref<128x8xf32, #tpu.memory_space<vmem>>, %arg3: memref<1x128xf32, #tpu.memory_space<vmem>>) attributes {dimension_semantics = [], scalar_prefetch = 0 : i64, scratch_operands = 0 : i64, tpu.core_type = #tpu.core_type<tc>} {
    %c0 = arith.constant 0 : index
    %c0_0 = arith.constant 0 : index
    %0 = vector.load %arg0[%c0, %c0_0] : memref<1x128xf32, #tpu.memory_space<vmem>>, vector<1x128xf32>
    %c0_1 = arith.constant 0 : index
    %c0_2 = arith.constant 0 : index
    %1 = vector.load %arg2[%c0_1, %c0_2] : memref<128x8xf32, #tpu.memory_space<vmem>>, vector<128x1xf32>
    %c0_3 = arith.constant 0 : index
    %c1 = arith.constant 1 : index
    %2 = vector.load %arg2[%c0_3, %c1] : memref<128x8xf32, #tpu.memory_space<vmem>>, vector<128x1xf32>
    %c0_4 = arith.constant 0 : index
    %c2 = arith.constant 2 : index
    %3 = vector.load %arg2[%c0_4, %c2] : memref<128x8xf32, #tpu.memory_space<vmem>>, vector<128x1xf32>
    %c0_5 = arith.constant 0 : index
    %c3 = arith.constant 3 : index
    %4 = vector.load %arg2[%c0_5, %c3] : memref<128x8xf32, #tpu.memory_space<vmem>>, vector<128x1xf32>
    %c0_6 = arith.constant 0 : index
    %c4 = arith.constant 4 : index
    %5 = vector.load %arg2[%c0_6, %c4] : memref<128x8xf32, #tpu.memory_space<vmem>>, vector<128x1xf32>
    %c0_7 = arith.constant 0 : index
    %c5 = arith.constant 5 : index
    %6 = vector.load %arg2[%c0_7, %c5] : memref<128x8xf32, #tpu.memory_space<vmem>>, vector<128x1xf32>
    %c0_8 = arith.constant 0 : index
    %c6 = arith.constant 6 : index
    %7 = vector.load %arg2[%c0_8, %c6] : memref<128x8xf32, #tpu.memory_space<vmem>>, vector<1x1xf32>
    %8 = vector.broadcast %1 : vector<128x1xf32> to vector<128x128xf32>
    %9 = vector.broadcast %0 : vector<1x128xf32> to vector<128x128xf32>
    %10 = arith.mulf %8, %9 : vector<128x128xf32>
    %11 = vector.broadcast %2 : vector<128x1xf32> to vector<128x128xf32>
    %12 = arith.addf %10, %11 : vector<128x128xf32>
    %cst = arith.constant 0.000000e+00 : f32
    %13 = vector.broadcast %cst : f32 to vector<128x128xf32>
    %14 = arith.maximumf %12, %13 : vector<128x128xf32>
    %c0_9 = arith.constant 0 : index
    %c0_10 = arith.constant 0 : index
    %c0_11 = arith.constant 0 : index
    %15 = vector.load %arg1[%c0_9, %c0_10, %c0_11] : memref<3x128x128xf32, #tpu.memory_space<vmem>>, vector<1x128x128xf32>
    %16 = vector.shape_cast %15 : vector<1x128x128xf32> to vector<128x128xf32>
    %cst_12 = arith.constant dense<0.000000e+00> : vector<128x128xf32>
    %17 = tpu.matmul %16, %14, %cst_12 {dimension_numbers = #tpu.dot_dimension_numbers<[1], [0], [0], [1], [0, 0, 1, 1], [], []>} : vector<128x128xf32>, vector<128x128xf32>, vector<128x128xf32> -> vector<128x128xf32>
    %18 = vector.broadcast %3 : vector<128x1xf32> to vector<128x128xf32>
    %19 = arith.addf %17, %18 : vector<128x128xf32>
    %cst_13 = arith.constant 0.000000e+00 : f32
    %20 = vector.broadcast %cst_13 : f32 to vector<128x128xf32>
    %21 = arith.maximumf %19, %20 : vector<128x128xf32>
    %c1_14 = arith.constant 1 : index
    %c0_15 = arith.constant 0 : index
    %c0_16 = arith.constant 0 : index
    %22 = vector.load %arg1[%c1_14, %c0_15, %c0_16] : memref<3x128x128xf32, #tpu.memory_space<vmem>>, vector<1x128x128xf32>
    %23 = vector.shape_cast %22 : vector<1x128x128xf32> to vector<128x128xf32>
    %cst_17 = arith.constant dense<0.000000e+00> : vector<128x128xf32>
    %24 = tpu.matmul %23, %21, %cst_17 {dimension_numbers = #tpu.dot_dimension_numbers<[1], [0], [0], [1], [0, 0, 1, 1], [], []>} : vector<128x128xf32>, vector<128x128xf32>, vector<128x128xf32> -> vector<128x128xf32>
    %25 = vector.broadcast %4 : vector<128x1xf32> to vector<128x128xf32>
    %26 = arith.addf %24, %25 : vector<128x128xf32>
    %cst_18 = arith.constant 0.000000e+00 : f32
    %27 = vector.broadcast %cst_18 : f32 to vector<128x128xf32>
    %28 = arith.maximumf %26, %27 : vector<128x128xf32>
    %c2_19 = arith.constant 2 : index
    %c0_20 = arith.constant 0 : index
    %c0_21 = arith.constant 0 : index
    %29 = vector.load %arg1[%c2_19, %c0_20, %c0_21] : memref<3x128x128xf32, #tpu.memory_space<vmem>>, vector<1x128x128xf32>
    %30 = vector.shape_cast %29 : vector<1x128x128xf32> to vector<128x128xf32>
    %cst_22 = arith.constant dense<0.000000e+00> : vector<128x128xf32>
    %31 = tpu.matmul %30, %28, %cst_22 {dimension_numbers = #tpu.dot_dimension_numbers<[1], [0], [0], [1], [0, 0, 1, 1], [], []>} : vector<128x128xf32>, vector<128x128xf32>, vector<128x128xf32> -> vector<128x128xf32>
    %32 = vector.broadcast %5 : vector<128x1xf32> to vector<128x128xf32>
    %33 = arith.addf %31, %32 : vector<128x128xf32>
    %cst_23 = arith.constant 0.000000e+00 : f32
    %34 = vector.broadcast %cst_23 : f32 to vector<128x128xf32>
    %35 = arith.maximumf %33, %34 : vector<128x128xf32>
    %36 = vector.broadcast %6 : vector<128x1xf32> to vector<128x128xf32>
    %37 = arith.mulf %36, %35 : vector<128x128xf32>
    %cst_24 = arith.constant dense<0.000000e+00> : vector<128xf32>
    %38 = vector.multi_reduction <add>, %37, %cst_24 [0] : vector<128x128xf32> to vector<128xf32>
    %39 = vector.shape_cast %38 : vector<128xf32> to vector<1x128xf32>
    %40 = vector.broadcast %7 : vector<1x1xf32> to vector<1x128xf32>
    %41 = arith.addf %39, %40 : vector<1x128xf32>
    %c0_25 = arith.constant 0 : index
    %c0_26 = arith.constant 0 : index
    %42 = vector.load %arg3[%c0_25, %c0_26] : memref<1x128xf32, #tpu.memory_space<vmem>>, vector<1x128xf32>
    tpu.vector_store %arg3[%c0_25, %c0_26], %41 {strides = array<i32>} : memref<1x128xf32, #tpu.memory_space<vmem>>, vector<1x128xf32>,
    return
  }
}

</mosaic_0001>

<llo_original>
// kernel: tpu_custom_call.1
$region0: #{tpu_custom_call.1}
  #allocation0 [shape = 'u32[]', space=smem, size = 0x4, offset = 0x4, fixed_abs, tag = 'smem constant byte address 0x4 - core index']
  #allocation1 [shape = 'u32[144,128]{1,0:T(1,128)}', space=vmem, size = 0x12000, scoped, tag = 'internal scratch']
  %s0 = inlined_call_operand.vmem [shape: f32[1,128], index: 0, kind: input, shape index: {}]
  %s1 = inlined_call_operand.hbm [shape: f32[3,128,128], index: 1, kind: input, shape index: {}]
  %s2 = inlined_call_operand.vmem [shape: f32[128,8], index: 2, kind: input, shape index: {}]
  %s3 = inlined_call_operand.hbm [shape: f32[1,128], index: 3, kind: output, shape index: {}]
  %s4 = sld [smem:[#allocation0]]
  $region26: #{tpu_custom_call.1} parent=0
    _
  %s6 = ssub.s32 1, %s4
  %s7 = scalar_select 0, %s6, %s4
  $region1: #{tpu_custom_call.1} parent=0
    #allocation2 [shape = 'u8[196608]{0}', space=vmem, size = 0x30000, scoped, tag = 'input window, operand 1, single buffered']
    #allocation3 [shape = 's32[1]{0}', space=sflag, size = 0x4, scoped, tag = 'scoped memory for tpu_custom_call.1']
    #allocation4 [shape = 's32[1]{0}', space=sflag, size = 0x4, scoped, tag = 'scoped memory for tpu_custom_call.1']
    #allocation5 [shape = 'u8[512]{0}', space=vmem, size = 0x400, scoped, tag = 'output window, operand 0, single buffered']
    %8 = vsyncpa [#allocation3], 0
    %9 = vsyncpa [#allocation4], 0
    // Predicated region
    $region2: #{tpu_custom_call.1} parent=1 // pred_check
      _
    $region3: #{tpu_custom_call.1} parent=1 // pred_check_branch
      %11 = sbr.rel (0) target = $region5
    $region4: #{tpu_custom_call.1} parent=1 // pred_region
      _
    $region5: #{tpu_custom_call.1} parent=1 // pred_fallthru
      _
    // Predicated region
    $region6: #{tpu_custom_call.1} parent=1 // pred_check
      _
    $region7: #{tpu_custom_call.1} parent=1 // pred_check_branch
      %13 = sbr.rel (0) target = $region9
    $region8: #{tpu_custom_call.1} parent=1 // pred_region
      %s15 = ssub.s32 6144, 6144
      %16 = vsyncadd [#allocation3], %s15
      %s17 = sshll.u32 [#allocation2], 4
      %s18 = int_to_ptr.vmem [resolvable:$true] %s17
      %23 = dma.hbm_to_vmem [thread:$0]  %s1, 6144, %s18, [#allocation3], 128, 128, 8
    $region9: #{tpu_custom_call.1} parent=1 // pred_fallthru
      _
    // Predicated region
    $region10: #{tpu_custom_call.1} parent=1 // pred_check
      _
    $region11: #{tpu_custom_call.1} parent=1 // pred_check_branch
      %25 = sbr.rel (0) target = $region13
    $region12: #{tpu_custom_call.1} parent=1 // pred_region
      _
    $region13: #{tpu_custom_call.1} parent=1 // pred_fallthru
      _
    // Predicated region
    $region14: #{tpu_custom_call.1} parent=1 // pred_check
      _
    $region15: #{tpu_custom_call.1} parent=1 // pred_check_branch
      %27 = sbr.rel (0) target = $region17
    $region16: #{tpu_custom_call.1} parent=1 // pred_region
      %28 = dma.done [#allocation3], 6144
    $region17: #{tpu_custom_call.1} parent=1 // pred_fallthru
      _
    %v29 = vld [vmem:[%s0] sm:$0x1]
    %v30 = vld [vmem:[%s2] sm:$0xff]
    %v31 = vld [vmem:[%s2 + $0x8] sm:$0xff]
    %v32 = vld [vmem:[%s2 + $0x10] sm:$0xff]
    %v33 = vld [vmem:[%s2 + $0x18] sm:$0xff]
    %v34 = vld [vmem:[%s2 + $0x20] sm:$0xff]
    %v35 = vld [vmem:[%s2 + $0x28] sm:$0xff]
    %v36 = vld [vmem:[%s2 + $0x30] sm:$0xff]
    %v37 = vld [vmem:[%s2 + $0x38] sm:$0xff]
    %v38 = vld [vmem:[%s2 + $0x40] sm:$0xff]
    %v39 = vld [vmem:[%s2 + $0x48] sm:$0xff]
    %v40 = vld [vmem:[%s2 + $0x50] sm:$0xff]
    %v41 = vld [vmem:[%s2 + $0x58] sm:$0xff]
    %v42 = vld [vmem:[%s2 + $0x60] sm:$0xff]
    %v43 = vld [vmem:[%s2 + $0x68] sm:$0xff]
    %v44 = vld [vmem:[%s2 + $0x70] sm:$0xff]
    %v45 = vld [vmem:[%s2 + $0x78] sm:$0xff]
    %v46 = vld [vmem:[%s2] sm:$0x1]
    %48 = vset.pattern.permute.xlu0 0
    %49 = vperm.xlu0 %48, %v30
    %v50 = vpop.permute.xlu0 %49
    %53 = vset.pattern.permute.xlu0 0
    %54 = vperm.xlu0 %53, %v31
    %v55 = vpop.permute.xlu0 %54
    %58 = vset.pattern.permute.xlu0 0
    %59 = vperm.xlu0 %58, %v32
    %v60 = vpop.permute.xlu0 %59
    %63 = vset.pattern.permute.xlu0 0
    %64 = vperm.xlu0 %63, %v33
    %v65 = vpop.permute.xlu0 %64
    %68 = vset.pattern.permute.xlu0 0
    %69 = vperm.xlu0 %68, %v34
    %v70 = vpop.permute.xlu0 %69
    %73 = vset.pattern.permute.xlu0 0
    %74 = vperm.xlu0 %73, %v35
    %v75 = vpop.permute.xlu0 %74
    %78 = vset.pattern.permute.xlu0 0
    %79 = vperm.xlu0 %78, %v36
    %v80 = vpop.permute.xlu0 %79
    %83 = vset.pattern.permute.xlu0 0
    %84 = vperm.xlu0 %83, %v37
    %v85 = vpop.permute.xlu0 %84
    %88 = vset.pattern.permute.xlu0 0
    %89 = vperm.xlu0 %88, %v38
    %v90 = vpop.permute.xlu0 %89
    %93 = vset.pattern.permute.xlu0 0
    %94 = vperm.xlu0 %93, %v39
    %v95 = vpop.permute.xlu0 %94
    %98 = vset.pattern.permute.xlu0 0
    %99 = vperm.xlu0 %98, %v40
    %v100 = vpop.permute.xlu0 %99
    %103 = vset.pattern.permute.xlu0 0
    %104 = vperm.xlu0 %103, %v41
    %v105 = vpop.permute.xlu0 %104
    %108 = vset.pattern.permute.xlu0 0
    %109 = vperm.xlu0 %108, %v42
    %v110 = vpop.permute.xlu0 %109
    %113 = vset.pattern.permute.xlu0 0
    %114 = vperm.xlu0 %113, %v43
    %v115 = vpop.permute.xlu0 %114
    %118 = vset.pattern.permute.xlu0 0
    %119 = vperm.xlu0 %118, %v44
    %v120 = vpop.permute.xlu0 %119
    %123 = vset.pattern.permute.xlu0 0
    %124 = vperm.xlu0 %123, %v45
    %v125 = vpop.permute.xlu0 %124
    %v128 = vlaneseq
    %v129 = vshrl.u32 %v128, 7
    %v130 = vsub.s32 0, %v129
    %v131 = vrot.slane %v29, %v130
    %v133 = vmul.f32 %v50, %v131
    %v134 = vmul.f32 %v55, %v131
    %v135 = vmul.f32 %v60, %v131
    %v136 = vmul.f32 %v65, %v131
    %v137 = vmul.f32 %v70, %v131
    %v138 = vmul.f32 %v75, %v131
    %v139 = vmul.f32 %v80, %v131
    %v140 = vmul.f32 %v85, %v131
    %v141 = vmul.f32 %v90, %v131
    %v142 = vmul.f32 %v95, %v131
    %v143 = vmul.f32 %v100, %v131
    %v144 = vmul.f32 %v105, %v131
    %v145 = vmul.f32 %v110, %v131
    %v146 = vmul.f32 %v115, %v131
    %v147 = vmul.f32 %v120, %v131
    %v148 = vmul.f32 %v125, %v131
    %149 = vset.pattern.permute.xlu0 1
    %150 = vperm.xlu0 %149, %v30
    %v151 = vpop.permute.xlu0 %150
    %153 = vset.pattern.permute.xlu0 1
    %154 = vperm.xlu0 %153, %v31
    %v155 = vpop.permute.xlu0 %154
    %157 = vset.pattern.permute.xlu0 1
    %158 = vperm.xlu0 %157, %v32
    %v159 = vpop.permute.xlu0 %158
    %161 = vset.pattern.permute.xlu0 1
    %162 = vperm.xlu0 %161, %v33
    %v163 = vpop.permute.xlu0 %162
    %165 = vset.pattern.permute.xlu0 1
    %166 = vperm.xlu0 %165, %v34
    %v167 = vpop.permute.xlu0 %166
    %169 = vset.pattern.permute.xlu0 1
    %170 = vperm.xlu0 %169, %v35
    %v171 = vpop.permute.xlu0 %170
    %173 = vset.pattern.permute.xlu0 1
    %174 = vperm.xlu0 %173, %v36
    %v175 = vpop.permute.xlu0 %174
    %177 = vset.pattern.permute.xlu0 1
    %178 = vperm.xlu0 %177, %v37
    %v179 = vpop.permute.xlu0 %178
    %181 = vset.pattern.permute.xlu0 1
    %182 = vperm.xlu0 %181, %v38
    %v183 = vpop.permute.xlu0 %182
    %185 = vset.pattern.permute.xlu0 1
    %186 = vperm.xlu0 %185, %v39
    %v187 = vpop.permute.xlu0 %186
    %189 = vset.pattern.permute.xlu0 1
    %190 = vperm.xlu0 %189, %v40
    %v191 = vpop.permute.xlu0 %190
    %193 = vset.pattern.permute.xlu0 1
    %194 = vperm.xlu0 %193, %v41
    %v195 = vpop.permute.xlu0 %194
    %197 = vset.pattern.permute.xlu0 1
    %198 = vperm.xlu0 %197, %v42
    %v199 = vpop.permute.xlu0 %198
    %201 = vset.pattern.permute.xlu0 1
    %202 = vperm.xlu0 %201, %v43
    %v203 = vpop.permute.xlu0 %202
    %205 = vset.pattern.permute.xlu0 1
    %206 = vperm.xlu0 %205, %v44
    %v207 = vpop.permute.xlu0 %206
    %209 = vset.pattern.permute.xlu0 1
    %210 = vperm.xlu0 %209, %v45
    %v211 = vpop.permute.xlu0 %210
    %v213 = vadd.f32 %v133, %v151
    %v214 = vadd.f32 %v134, %v155
    %v215 = vadd.f32 %v135, %v159
    %v216 = vadd.f32 %v136, %v163
    %v217 = vadd.f32 %v137, %v167
    %v218 = vadd.f32 %v138, %v171
    %v219 = vadd.f32 %v139, %v175
    %v220 = vadd.f32 %v140, %v179
    %v221 = vadd.f32 %v141, %v183
    %v222 = vadd.f32 %v142, %v187
    %v223 = vadd.f32 %v143, %v191
    %v224 = vadd.f32 %v144, %v195
    %v225 = vadd.f32 %v145, %v199
    %v226 = vadd.f32 %v146, %v203
    %v227 = vadd.f32 %v147, %v207
    %v228 = vadd.f32 %v148, %v211
    %v229 = vmax.f32 %v213, 0.0
    %v230 = vmax.f32 %v214, 0.0
    %v231 = vmax.f32 %v215, 0.0
    %v232 = vmax.f32 %v216, 0.0
    %v233 = vmax.f32 %v217, 0.0
    %v234 = vmax.f32 %v218, 0.0
    %v235 = vmax.f32 %v219, 0.0
    %v236 = vmax.f32 %v220, 0.0
    %v237 = vmax.f32 %v221, 0.0
    %v238 = vmax.f32 %v222, 0.0
    %v239 = vmax.f32 %v223, 0.0
    %v240 = vmax.f32 %v224, 0.0
    %v241 = vmax.f32 %v225, 0.0
    %v242 = vmax.f32 %v226, 0.0
    %v243 = vmax.f32 %v227, 0.0
    %v244 = vmax.f32 %v228, 0.0
    %v245 = vld [vmem:[#allocation2] sm:$0xff]
    %v246 = vld [vmem:[#allocation2 + $0x8] sm:$0xff]
    %v247 = vld [vmem:[#allocation2 + $0x10] sm:$0xff]
    %v248 = vld [vmem:[#allocation2 + $0x18] sm:$0xff]
    %v249 = vld [vmem:[#allocation2 + $0x20] sm:$0xff]
    %v250 = vld [vmem:[#allocation2 + $0x28] sm:$0xff]
    %v251 = vld [vmem:[#allocation2 + $0x30] sm:$0xff]
    %v252 = vld [vmem:[#allocation2 + $0x38] sm:$0xff]
    %v253 = vld [vmem:[#allocation2 + $0x40] sm:$0xff]
    %v254 = vld [vmem:[#allocation2 + $0x48] sm:$0xff]
    %v255 = vld [vmem:[#allocation2 + $0x50] sm:$0xff]
    %v256 = vld [vmem:[#allocation2 + $0x58] sm:$0xff]
    %v257 = vld [vmem:[#allocation2 + $0x60] sm:$0xff]
    %v258 = vld [vmem:[#allocation2 + $0x68] sm:$0xff]
    %v259 = vld [vmem:[#allocation2 + $0x70] sm:$0xff]
    %v260 = vld [vmem:[#allocation2 + $0x78] sm:$0xff]
    %261 = vset.pattern.permute.xlu0 2
    %262 = vperm.xlu0 %261, %v30
    %v263 = vpop.permute.xlu0 %262
    %265 = vset.pattern.permute.xlu0 2
    %266 = vperm.xlu0 %265, %v31
    %v267 = vpop.permute.xlu0 %266
    %269 = vset.pattern.permute.xlu0 2
    %270 = vperm.xlu0 %269, %v32
    %v271 = vpop.permute.xlu0 %270
    %273 = vset.pattern.permute.xlu0 2
    %274 = vperm.xlu0 %273, %v33
    %v275 = vpop.permute.xlu0 %274
    %277 = vset.pattern.permute.xlu0 2
    %278 = vperm.xlu0 %277, %v34
    %v279 = vpop.permute.xlu0 %278
    %281 = vset.pattern.permute.xlu0 2
    %282 = vperm.xlu0 %281, %v35
    %v283 = vpop.permute.xlu0 %282
    %285 = vset.pattern.permute.xlu0 2
    %286 = vperm.xlu0 %285, %v36
    %v287 = vpop.permute.xlu0 %286
    %289 = vset.pattern.permute.xlu0 2
    %290 = vperm.xlu0 %289, %v37
    %v291 = vpop.permute.xlu0 %290
    %293 = vset.pattern.permute.xlu0 2
    %294 = vperm.xlu0 %293, %v38
    %v295 = vpop.permute.xlu0 %294
    %297 = vset.pattern.permute.xlu0 2
    %298 = vperm.xlu0 %297, %v39
    %v299 = vpop.permute.xlu0 %298
    %301 = vset.pattern.permute.xlu0 2
    %302 = vperm.xlu0 %301, %v40
    %v303 = vpop.permute.xlu0 %302
    %305 = vset.pattern.permute.xlu0 2
    %306 = vperm.xlu0 %305, %v41
    %v307 = vpop.permute.xlu0 %306
    %309 = vset.pattern.permute.xlu0 2
    %310 = vperm.xlu0 %309, %v42
    %v311 = vpop.permute.xlu0 %310
    %313 = vset.pattern.permute.xlu0 2
    %314 = vperm.xlu0 %313, %v43
    %v315 = vpop.permute.xlu0 %314
    %317 = vset.pattern.permute.xlu0 2
    %318 = vperm.xlu0 %317, %v44
    %v319 = vpop.permute.xlu0 %318
    %321 = vset.pattern.permute.xlu0 2
    %322 = vperm.xlu0 %321, %v45
    %v323 = vpop.permute.xlu0 %322
    %325 = vmatprep.subr.mxu0 0.0
    %326 = vmatpush1.msra.mxu0 %v229
    %327 = vmatprep.subr.mxu0 0.0
    %328 = vmatpush1.msra.mxu0 %v230
    %329 = vmatprep.subr.mxu0 0.0
    %330 = vmatpush1.msra.mxu0 %v231
    %331 = vmatprep.subr.mxu0 0.0
    %332 = vmatpush1.msra.mxu0 %v232
    %333 = vmatprep.subr.mxu0 0.0
    %334 = vmatpush1.msra.mxu0 %v233
    %335 = vmatprep.subr.mxu0 0.0
    %336 = vmatpush1.msra.mxu0 %v234
    %337 = vmatprep.subr.mxu0 0.0
    %338 = vmatpush1.msra.mxu0 %v235
    %339 = vmatprep.subr.mxu0 0.0
    %340 = vmatpush1.msra.mxu0 %v236
    %341 = vmatprep.subr.mxu0 0.0
    %342 = vmatpush1.msra.mxu0 %v237
    %343 = vmatprep.subr.mxu0 0.0
    %344 = vmatpush1.msra.mxu0 %v238
    %345 = vmatprep.subr.mxu0 0.0
    %346 = vmatpush1.msra.mxu0 %v239
    %347 = vmatprep.subr.mxu0 0.0
    %348 = vmatpush1.msra.mxu0 %v240
    %349 = vmatprep.subr.mxu0 0.0
    %350 = vmatpush1.msra.mxu0 %v241
    %351 = vmatprep.subr.mxu0 0.0
    %352 = vmatpush1.msra.mxu0 %v242
    %353 = vmatprep.subr.mxu0 0.0
    %354 = vmatpush1.msra.mxu0 %v243
    %355 = vmatprep.subr.mxu0 0.0
    %356 = vmatpush1.msra.mxu0 %v244
    %357 = vmatprep.subr.mxu0 0.0
    %358 = vmatpush1.msra.mxu0 0.0
    %359 = vmatprep.subr.mxu0 0.0
    %360 = vmatpush1.msra.mxu0 0.0
    %361 = vmatprep.subr.mxu0 0.0
    %362 = vmatpush1.msra.mxu0 0.0
    %363 = vmatprep.subr.mxu0 0.0
    %364 = vmatpush1.msra.mxu0 0.0
    %365 = vmatprep.subr.mxu0 0.0
    %366 = vmatpush1.msra.mxu0 0.0
    %367 = vmatprep.subr.mxu0 0.0
    %368 = vmatpush1.msra.mxu0 0.0
    %369 = vmatprep.subr.mxu0 0.0
    %370 = vmatpush1.msra.mxu0 0.0
    %371 = vmatprep.subr.mxu0 0.0
    %372 = vmatpush1.msra.mxu0 0.0
    %373 = vmatprep.subr.mxu0 0.0
    %374 = vmatpush1.msra.mxu0 0.0
    %375 = vmatprep.subr.mxu0 0.0
    %376 = vmatpush1.msra.mxu0 0.0
    %377 = vmatprep.subr.mxu0 0.0
    %378 = vmatpush1.msra.mxu0 0.0
    %379 = vmatprep.subr.mxu0 0.0
    %380 = vmatpush1.msra.mxu0 0.0
    %381 = vmatprep.subr.mxu0 0.0
    %382 = vmatpush1.msra.mxu0 0.0
    %383 = vmatprep.subr.mxu0 0.0
    %384 = vmatpush1.msra.mxu0 0.0
    %385 = vmatprep.subr.mxu0 0.0
    %386 = vmatpush1.msra.mxu0 0.0
    %387 = vmatprep.subr.mxu0 0.0
    %388 = vmatpush1.msra.mxu0 0.0
    %389 = vmatprep.mubr.f32.mxu0 0.0
    %390 = vmatmul.mubr.f32.gmra.mrb[0].mxu0 %v245
    %v391 = vpop.f32.mrb[0].mxu0
    %v392 = vadd.f32 %v263, %v391
    %v393 = vpop.f32.mrb[0].mxu0
    %394 = vmatprep.mubr.f32.mxu0 0.0
    %395 = vmatmul.mubr.f32.gmra.mrb[0].mxu0 %v246
    %v396 = vpop.f32.mrb[0].mxu0
    %v397 = vadd.f32 %v267, %v396
    %v398 = vpop.f32.mrb[0].mxu0
    %399 = vmatprep.mubr.f32.mxu0 0.0
    %400 = vmatmul.mubr.f32.gmra.mrb[0].mxu0 %v247
    %v401 = vpop.f32.mrb[0].mxu0
    %v402 = vadd.f32 %v271, %v401
    %v403 = vpop.f32.mrb[0].mxu0
    %404 = vmatprep.mubr.f32.mxu0 0.0
    %405 = vmatmul.mubr.f32.gmra.mrb[0].mxu0 %v248
    %v406 = vpop.f32.mrb[0].mxu0
    %v407 = vadd.f32 %v275, %v406
    %v408 = vpop.f32.mrb[0].mxu0
    %409 = vmatprep.mubr.f32.mxu0 0.0
    %410 = vmatmul.mubr.f32.gmra.mrb[0].mxu0 %v249
    %v411 = vpop.f32.mrb[0].mxu0
    %v412 = vadd.f32 %v279, %v411
    %v413 = vpop.f32.mrb[0].mxu0
    %414 = vmatprep.mubr.f32.mxu0 0.0
    %415 = vmatmul.mubr.f32.gmra.mrb[0].mxu0 %v250
    %v416 = vpop.f32.mrb[0].mxu0
    %v417 = vadd.f32 %v283, %v416
    %v418 = vpop.f32.mrb[0].mxu0
    %419 = vmatprep.mubr.f32.mxu0 0.0
    %420 = vmatmul.mubr.f32.gmra.mrb[0].mxu0 %v251
    %v421 = vpop.f32.mrb[0].mxu0
    %v422 = vadd.f32 %v287, %v421
    %v423 = vpop.f32.mrb[0].mxu0
    %424 = vmatprep.mubr.f32.mxu0 0.0
    %425 = vmatmul.mubr.f32.gmra.mrb[0].mxu0 %v252
    %v426 = vpop.f32.mrb[0].mxu0
    %v427 = vadd.f32 %v291, %v426
    %v428 = vpop.f32.mrb[0].mxu0
    %429 = vmatprep.mubr.f32.mxu0 0.0
    %430 = vmatmul.mubr.f32.gmra.mrb[0].mxu0 %v253
    %v431 = vpop.f32.mrb[0].mxu0
    %v432 = vadd.f32 %v295, %v431
    %v433 = vpop.f32.mrb[0].mxu0
    %434 = vmatprep.mubr.f32.mxu0 0.0
    %435 = vmatmul.mubr.f32.gmra.mrb[0].mxu0 %v254
    %v436 = vpop.f32.mrb[0].mxu0
    %v437 = vadd.f32 %v299, %v436
    %v438 = vpop.f32.mrb[0].mxu0
    %439 = vmatprep.mubr.f32.mxu0 0.0
    %440 = vmatmul.mubr.f32.gmra.mrb[0].mxu0 %v255
    %v441 = vpop.f32.mrb[0].mxu0
    %v442 = vadd.f32 %v303, %v441
    %v443 = vpop.f32.mrb[0].mxu0
    %444 = vmatprep.mubr.f32.mxu0 0.0
    %445 = vmatmul.mubr.f32.gmra.mrb[0].mxu0 %v256
    %v446 = vpop.f32.mrb[0].mxu0
    %v447 = vadd.f32 %v307, %v446
    %v448 = vpop.f32.mrb[0].mxu0
    %449 = vmatprep.mubr.f32.mxu0 0.0
    %450 = vmatmul.mubr.f32.gmra.mrb[0].mxu0 %v257
    %v451 = vpop.f32.mrb[0].mxu0
    %v452 = vadd.f32 %v311, %v451
    %v453 = vpop.f32.mrb[0].mxu0
    %454 = vmatprep.mubr.f32.mxu0 0.0
    %455 = vmatmul.mubr.f32.gmra.mrb[0].mxu0 %v258
    %v456 = vpop.f32.mrb[0].mxu0
    %v457 = vadd.f32 %v315, %v456
    %v458 = vpop.f32.mrb[0].mxu0
    %459 = vmatprep.mubr.f32.mxu0 0.0
    %460 = vmatmul.mubr.f32.gmra.mrb[0].mxu0 %v259
    %v461 = vpop.f32.mrb[0].mxu0
    %v462 = vadd.f32 %v319, %v461
    %v463 = vpop.f32.mrb[0].mxu0
    %464 = vmatprep.mubr.f32.mxu0 0.0
    %465 = vmatmul.mubr.f32.gmra.mrb[0].mxu0 %v260
    %v466 = vpop.f32.mrb[0].mxu0
    %v467 = vadd.f32 %v323, %v466
    %v468 = vpop.f32.mrb[0].mxu0
    %469 = vdwg.mxu0
    %v470 = vmax.f32 %v392, 0.0
    %v471 = vmax.f32 %v397, 0.0
    %v472 = vmax.f32 %v402, 0.0
    %v473 = vmax.f32 %v407, 0.0
    %v474 = vmax.f32 %v412, 0.0
    %v475 = vmax.f32 %v417, 0.0
    %v476 = vmax.f32 %v422, 0.0
    %v477 = vmax.f32 %v427, 0.0
    %v478 = vmax.f32 %v432, 0.0
    %v479 = vmax.f32 %v437, 0.0
    %v480 = vmax.f32 %v442, 0.0
    %v481 = vmax.f32 %v447, 0.0
    %v482 = vmax.f32 %v452, 0.0
    %v483 = vmax.f32 %v457, 0.0
    %v484 = vmax.f32 %v462, 0.0
    %v485 = vmax.f32 %v467, 0.0
    %s486 = scalar_lea.vmem [#allocation2], 128
    %v487 = vld [vmem:[%s486] sm:$0xff]
    %v488 = vld [vmem:[%s486 + $0x8] sm:$0xff]
    %v489 = vld [vmem:[%s486 + $0x10] sm:$0xff]
    %v490 = vld [vmem:[%s486 + $0x18] sm:$0xff]
    %v491 = vld [vmem:[%s486 + $0x20] sm:$0xff]
    %v492 = vld [vmem:[%s486 + $0x28] sm:$0xff]
    %v493 = vld [vmem:[%s486 + $0x30] sm:$0xff]
    %v494 = vld [vmem:[%s486 + $0x38] sm:$0xff]
    %v495 = vld [vmem:[%s486 + $0x40] sm:$0xff]
    %v496 = vld [vmem:[%s486 + $0x48] sm:$0xff]
    %v497 = vld [vmem:[%s486 + $0x50] sm:$0xff]
    %v498 = vld [vmem:[%s486 + $0x58] sm:$0xff]
    %v499 = vld [vmem:[%s486 + $0x60] sm:$0xff]
    %v500 = vld [vmem:[%s486 + $0x68] sm:$0xff]
    %v501 = vld [vmem:[%s486 + $0x70] sm:$0xff]
    %v502 = vld [vmem:[%s486 + $0x78] sm:$0xff]
    %503 = vset.pattern.permute.xlu0 3
    %504 = vperm.xlu0 %503, %v30
    %v505 = vpop.permute.xlu0 %504
    %507 = vset.pattern.permute.xlu0 3
    %508 = vperm.xlu0 %507, %v31
    %v509 = vpop.permute.xlu0 %508
    %511 = vset.pattern.permute.xlu0 3
    %512 = vperm.xlu0 %511, %v32
    %v513 = vpop.permute.xlu0 %512
    %515 = vset.pattern.permute.xlu0 3
    %516 = vperm.xlu0 %515, %v33
    %v517 = vpop.permute.xlu0 %516
    %519 = vset.pattern.permute.xlu0 3
    %520 = vperm.xlu0 %519, %v34
    %v521 = vpop.permute.xlu0 %520
    %523 = vset.pattern.permute.xlu0 3
    %524 = vperm.xlu0 %523, %v35
    %v525 = vpop.permute.xlu0 %524
    %527 = vset.pattern.permute.xlu0 3
    %528 = vperm.xlu0 %527, %v36
    %v529 = vpop.permute.xlu0 %528
    %531 = vset.pattern.permute.xlu0 3
    %532 = vperm.xlu0 %531, %v37
    %v533 = vpop.permute.xlu0 %532
    %535 = vset.pattern.permute.xlu0 3
    %536 = vperm.xlu0 %535, %v38
    %v537 = vpop.permute.xlu0 %536
    %539 = vset.pattern.permute.xlu0 3
    %540 = vperm.xlu0 %539, %v39
    %v541 = vpop.permute.xlu0 %540
    %543 = vset.pattern.permute.xlu0 3
    %544 = vperm.xlu0 %543, %v40
    %v545 = vpop.permute.xlu0 %544
    %547 = vset.pattern.permute.xlu0 3
    %548 = vperm.xlu0 %547, %v41
    %v549 = vpop.permute.xlu0 %548
    %551 = vset.pattern.permute.xlu0 3
    %552 = vperm.xlu0 %551, %v42
    %v553 = vpop.permute.xlu0 %552
    %555 = vset.pattern.permute.xlu0 3
    %556 = vperm.xlu0 %555, %v43
    %v557 = vpop.permute.xlu0 %556
    %559 = vset.pattern.permute.xlu0 3
    %560 = vperm.xlu0 %559, %v44
    %v561 = vpop.permute.xlu0 %560
    %563 = vset.pattern.permute.xlu0 3
    %564 = vperm.xlu0 %563, %v45
    %v565 = vpop.permute.xlu0 %564
    %567 = vmatprep.subr.mxu0 0.0
    %568 = vmatpush1.msra.mxu0 %v470
    %569 = vmatprep.subr.mxu0 0.0
    %570 = vmatpush1.msra.mxu0 %v471
    %571 = vmatprep.subr.mxu0 0.0
    %572 = vmatpush1.msra.mxu0 %v472
    %573 = vmatprep.subr.mxu0 0.0
    %574 = vmatpush1.msra.mxu0 %v473
    %575 = vmatprep.subr.mxu0 0.0
    %576 = vmatpush1.msra.mxu0 %v474
    %577 = vmatprep.subr.mxu0 0.0
    %578 = vmatpush1.msra.mxu0 %v475
    %579 = vmatprep.subr.mxu0 0.0
    %580 = vmatpush1.msra.mxu0 %v476
    %581 = vmatprep.subr.mxu0 0.0
    %582 = vmatpush1.msra.mxu0 %v477
    %583 = vmatprep.subr.mxu0 0.0
    %584 = vmatpush1.msra.mxu0 %v478
    %585 = vmatprep.subr.mxu0 0.0
    %586 = vmatpush1.msra.mxu0 %v479
    %587 = vmatprep.subr.mxu0 0.0
    %588 = vmatpush1.msra.mxu0 %v480
    %589 = vmatprep.subr.mxu0 0.0
    %590 = vmatpush1.msra.mxu0 %v481
    %591 = vmatprep.subr.mxu0 0.0
    %592 = vmatpush1.msra.mxu0 %v482
    %593 = vmatprep.subr.mxu0 0.0
    %594 = vmatpush1.msra.mxu0 %v483
    %595 = vmatprep.subr.mxu0 0.0
    %596 = vmatpush1.msra.mxu0 %v484
    %597 = vmatprep.subr.mxu0 0.0
    %598 = vmatpush1.msra.mxu0 %v485
    %599 = vmatprep.subr.mxu0 0.0
    %600 = vmatpush1.msra.mxu0 0.0
    %601 = vmatprep.subr.mxu0 0.0
    %602 = vmatpush1.msra.mxu0 0.0
    %603 = vmatprep.subr.mxu0 0.0
    %604 = vmatpush1.msra.mxu0 0.0
    %605 = vmatprep.subr.mxu0 0.0
    %606 = vmatpush1.msra.mxu0 0.0
    %607 = vmatprep.subr.mxu0 0.0
    %608 = vmatpush1.msra.mxu0 0.0
    %609 = vmatprep.subr.mxu0 0.0
    %610 = vmatpush1.msra.mxu0 0.0
    %611 = vmatprep.subr.mxu0 0.0
    %612 = vmatpush1.msra.mxu0 0.0
    %613 = vmatprep.subr.mxu0 0.0
    %614 = vmatpush1.msra.mxu0 0.0
    %615 = vmatprep.subr.mxu0 0.0
    %616 = vmatpush1.msra.mxu0 0.0
    %617 = vmatprep.subr.mxu0 0.0
    %618 = vmatpush1.msra.mxu0 0.0
    %619 = vmatprep.subr.mxu0 0.0
    %620 = vmatpush1.msra.mxu0 0.0
    %621 = vmatprep.subr.mxu0 0.0
    %622 = vmatpush1.msra.mxu0 0.0
    %623 = vmatprep.subr.mxu0 0.0
    %624 = vmatpush1.msra.mxu0 0.0
    %625 = vmatprep.subr.mxu0 0.0
    %626 = vmatpush1.msra.mxu0 0.0
    %627 = vmatprep.subr.mxu0 0.0
    %628 = vmatpush1.msra.mxu0 0.0
    %629 = vmatprep.subr.mxu0 0.0
    %630 = vmatpush1.msra.mxu0 0.0
    %631 = vmatprep.mubr.f32.mxu0 0.0
    %632 = vmatmul.mubr.f32.gmra.mrb[0].mxu0 %v487
    %v633 = vpop.f32.mrb[0].mxu0
    %v634 = vadd.f32 %v505, %v633
    %v635 = vpop.f32.mrb[0].mxu0
    %636 = vmatprep.mubr.f32.mxu0 0.0
    %637 = vmatmul.mubr.f32.gmra.mrb[0].mxu0 %v488
    %v638 = vpop.f32.mrb[0].mxu0
    %v639 = vadd.f32 %v509, %v638
    %v640 = vpop.f32.mrb[0].mxu0
    %641 = vmatprep.mubr.f32.mxu0 0.0
    %642 = vmatmul.mubr.f32.gmra.mrb[0].mxu0 %v489
    %v643 = vpop.f32.mrb[0].mxu0
    %v644 = vadd.f32 %v513, %v643
    %v645 = vpop.f32.mrb[0].mxu0
    %646 = vmatprep.mubr.f32.mxu0 0.0
    %647 = vmatmul.mubr.f32.gmra.mrb[0].mxu0 %v490
    %v648 = vpop.f32.mrb[0].mxu0
    %v649 = vadd.f32 %v517, %v648
    %v650 = vpop.f32.mrb[0].mxu0
    %651 = vmatprep.mubr.f32.mxu0 0.0
    %652 = vmatmul.mubr.f32.gmra.mrb[0].mxu0 %v491
    %v653 = vpop.f32.mrb[0].mxu0
    %v654 = vadd.f32 %v521, %v653
    %v655 = vpop.f32.mrb[0].mxu0
    %656 = vmatprep.mubr.f32.mxu0 0.0
    %657 = vmatmul.mubr.f32.gmra.mrb[0].mxu0 %v492
    %v658 = vpop.f32.mrb[0].mxu0
    %v659 = vadd.f32 %v525, %v658
    %v660 = vpop.f32.mrb[0].mxu0
    %661 = vmatprep.mubr.f32.mxu0 0.0
    %662 = vmatmul.mubr.f32.gmra.mrb[0].mxu0 %v493
    %v663 = vpop.f32.mrb[0].mxu0
    %v664 = vadd.f32 %v529, %v663
    %v665 = vpop.f32.mrb[0].mxu0
    %666 = vmatprep.mubr.f32.mxu0 0.0
    %667 = vmatmul.mubr.f32.gmra.mrb[0].mxu0 %v494
    %v668 = vpop.f32.mrb[0].mxu0
    %v669 = vadd.f32 %v533, %v668
    %v670 = vpop.f32.mrb[0].mxu0
    %671 = vmatprep.mubr.f32.mxu0 0.0
    %672 = vmatmul.mubr.f32.gmra.mrb[0].mxu0 %v495
    %v673 = vpop.f32.mrb[0].mxu0
    %v674 = vadd.f32 %v537, %v673
    %v675 = vpop.f32.mrb[0].mxu0
    %676 = vmatprep.mubr.f32.mxu0 0.0
    %677 = vmatmul.mubr.f32.gmra.mrb[0].mxu0 %v496
    %v678 = vpop.f32.mrb[0].mxu0
    %v679 = vadd.f32 %v541, %v678
    %v680 = vpop.f32.mrb[0].mxu0
    %681 = vmatprep.mubr.f32.mxu0 0.0
    %682 = vmatmul.mubr.f32.gmra.mrb[0].mxu0 %v497
    %v683 = vpop.f32.mrb[0].mxu0
    %v684 = vadd.f32 %v545, %v683
    %v685 = vpop.f32.mrb[0].mxu0
    %686 = vmatprep.mubr.f32.mxu0 0.0
    %687 = vmatmul.mubr.f32.gmra.mrb[0].mxu0 %v498
    %v688 = vpop.f32.mrb[0].mxu0
    %v689 = vadd.f32 %v549, %v688
    %v690 = vpop.f32.mrb[0].mxu0
    %691 = vmatprep.mubr.f32.mxu0 0.0
    %692 = vmatmul.mubr.f32.gmra.mrb[0].mxu0 %v499
    %v693 = vpop.f32.mrb[0].mxu0
    %v694 = vadd.f32 %v553, %v693
    %v695 = vpop.f32.mrb[0].mxu0
    %696 = vmatprep.mubr.f32.mxu0 0.0
    %697 = vmatmul.mubr.f32.gmra.mrb[0].mxu0 %v500
    %v698 = vpop.f32.mrb[0].mxu0
    %v699 = vadd.f32 %v557, %v698
    %v700 = vpop.f32.mrb[0].mxu0
    %701 = vmatprep.mubr.f32.mxu0 0.0
    %702 = vmatmul.mubr.f32.gmra.mrb[0].mxu0 %v501
    %v703 = vpop.f32.mrb[0].mxu0
    %v704 = vadd.f32 %v561, %v703
    %v705 = vpop.f32.mrb[0].mxu0
    %706 = vmatprep.mubr.f32.mxu0 0.0
    %707 = vmatmul.mubr.f32.gmra.mrb[0].mxu0 %v502
    %v708 = vpop.f32.mrb[0].mxu0
    %v709 = vadd.f32 %v565, %v708
    %v710 = vpop.f32.mrb[0].mxu0
    %711 = vdwg.mxu0
    %v712 = vmax.f32 %v634, 0.0
    %v713 = vmax.f32 %v639, 0.0
    %v714 = vmax.f32 %v644, 0.0
    %v715 = vmax.f32 %v649, 0.0
    %v716 = vmax.f32 %v654, 0.0
    %v717 = vmax.f32 %v659, 0.0
    %v718 = vmax.f32 %v664, 0.0
    %v719 = vmax.f32 %v669, 0.0
    %v720 = vmax.f32 %v674, 0.0
    %v721 = vmax.f32 %v679, 0.0
    %v722 = vmax.f32 %v684, 0.0
    %v723 = vmax.f32 %v689, 0.0
    %v724 = vmax.f32 %v694, 0.0
    %v725 = vmax.f32 %v699, 0.0
    %v726 = vmax.f32 %v704, 0.0
    %v727 = vmax.f32 %v709, 0.0
    %s728 = scalar_lea.vmem [#allocation2], 256
    %v729 = vld [vmem:[%s728] sm:$0xff]
    %v730 = vld [vmem:[%s728 + $0x8] sm:$0xff]
    %v731 = vld [vmem:[%s728 + $0x10] sm:$0xff]
    %v732 = vld [vmem:[%s728 + $0x18] sm:$0xff]
    %v733 = vld [vmem:[%s728 + $0x20] sm:$0xff]
    %v734 = vld [vmem:[%s728 + $0x28] sm:$0xff]
    %v735 = vld [vmem:[%s728 + $0x30] sm:$0xff]
    %v736 = vld [vmem:[%s728 + $0x38] sm:$0xff]
    %v737 = vld [vmem:[%s728 + $0x40] sm:$0xff]
    %v738 = vld [vmem:[%s728 + $0x48] sm:$0xff]
    %v739 = vld [vmem:[%s728 + $0x50] sm:$0xff]
    %v740 = vld [vmem:[%s728 + $0x58] sm:$0xff]
    %v741 = vld [vmem:[%s728 + $0x60] sm:$0xff]
    %v742 = vld [vmem:[%s728 + $0x68] sm:$0xff]
    %v743 = vld [vmem:[%s728 + $0x70] sm:$0xff]
    %v744 = vld [vmem:[%s728 + $0x78] sm:$0xff]
    %745 = vset.pattern.permute.xlu0 4
    %746 = vperm.xlu0 %745, %v30
    %v747 = vpop.permute.xlu0 %746
    %749 = vset.pattern.permute.xlu0 4
    %750 = vperm.xlu0 %749, %v31
    %v751 = vpop.permute.xlu0 %750
    %753 = vset.pattern.permute.xlu0 4
    %754 = vperm.xlu0 %753, %v32
    %v755 = vpop.permute.xlu0 %754
    %757 = vset.pattern.permute.xlu0 4
    %758 = vperm.xlu0 %757, %v33
    %v759 = vpop.permute.xlu0 %758
    %761 = vset.pattern.permute.xlu0 4
    %762 = vperm.xlu0 %761, %v34
    %v763 = vpop.permute.xlu0 %762
    %765 = vset.pattern.permute.xlu0 4
    %766 = vperm.xlu0 %765, %v35
    %v767 = vpop.permute.xlu0 %766
    %769 = vset.pattern.permute.xlu0 4
    %770 = vperm.xlu0 %769, %v36
    %v771 = vpop.permute.xlu0 %770
    %773 = vset.pattern.permute.xlu0 4
    %774 = vperm.xlu0 %773, %v37
    %v775 = vpop.permute.xlu0 %774
    %777 = vset.pattern.permute.xlu0 4
    %778 = vperm.xlu0 %777, %v38
    %v779 = vpop.permute.xlu0 %778
    %781 = vset.pattern.permute.xlu0 4
    %782 = vperm.xlu0 %781, %v39
    %v783 = vpop.permute.xlu0 %782
    %785 = vset.pattern.permute.xlu0 4
    %786 = vperm.xlu0 %785, %v40
    %v787 = vpop.permute.xlu0 %786
    %789 = vset.pattern.permute.xlu0 4
    %790 = vperm.xlu0 %789, %v41
    %v791 = vpop.permute.xlu0 %790
    %793 = vset.pattern.permute.xlu0 4
    %794 = vperm.xlu0 %793, %v42
    %v795 = vpop.permute.xlu0 %794
    %797 = vset.pattern.permute.xlu0 4
    %798 = vperm.xlu0 %797, %v43
    %v799 = vpop.permute.xlu0 %798
    %801 = vset.pattern.permute.xlu0 4
    %802 = vperm.xlu0 %801, %v44
    %v803 = vpop.permute.xlu0 %802
    %805 = vset.pattern.permute.xlu0 4
    %806 = vperm.xlu0 %805, %v45
    %v807 = vpop.permute.xlu0 %806
    %809 = vmatprep.subr.mxu0 0.0
    %810 = vmatpush1.msra.mxu0 %v712
    %811 = vmatprep.subr.mxu0 0.0
    %812 = vmatpush1.msra.mxu0 %v713
    %813 = vmatprep.subr.mxu0 0.0
    %814 = vmatpush1.msra.mxu0 %v714
    %815 = vmatprep.subr.mxu0 0.0
    %816 = vmatpush1.msra.mxu0 %v715
    %817 = vmatprep.subr.mxu0 0.0
    %818 = vmatpush1.msra.mxu0 %v716
    %819 = vmatprep.subr.mxu0 0.0
    %820 = vmatpush1.msra.mxu0 %v717
    %821 = vmatprep.subr.mxu0 0.0
    %822 = vmatpush1.msra.mxu0 %v718
    %823 = vmatprep.subr.mxu0 0.0
    %824 = vmatpush1.msra.mxu0 %v719
    %825 = vmatprep.subr.mxu0 0.0
    %826 = vmatpush1.msra.mxu0 %v720
    %827 = vmatprep.subr.mxu0 0.0
    %828 = vmatpush1.msra.mxu0 %v721
    %829 = vmatprep.subr.mxu0 0.0
    %830 = vmatpush1.msra.mxu0 %v722
    %831 = vmatprep.subr.mxu0 0.0
    %832 = vmatpush1.msra.mxu0 %v723
    %833 = vmatprep.subr.mxu0 0.0
    %834 = vmatpush1.msra.mxu0 %v724
    %835 = vmatprep.subr.mxu0 0.0
    %836 = vmatpush1.msra.mxu0 %v725
    %837 = vmatprep.subr.mxu0 0.0
    %838 = vmatpush1.msra.mxu0 %v726
    %839 = vmatprep.subr.mxu0 0.0
    %840 = vmatpush1.msra.mxu0 %v727
    %841 = vmatprep.subr.mxu0 0.0
    %842 = vmatpush1.msra.mxu0 0.0
    %843 = vmatprep.subr.mxu0 0.0
    %844 = vmatpush1.msra.mxu0 0.0
    %845 = vmatprep.subr.mxu0 0.0
    %846 = vmatpush1.msra.mxu0 0.0
    %847 = vmatprep.subr.mxu0 0.0
    %848 = vmatpush1.msra.mxu0 0.0
    %849 = vmatprep.subr.mxu0 0.0
    %850 = vmatpush1.msra.mxu0 0.0
    %851 = vmatprep.subr.mxu0 0.0
    %852 = vmatpush1.msra.mxu0 0.0
    %853 = vmatprep.subr.mxu0 0.0
    %854 = vmatpush1.msra.mxu0 0.0
    %855 = vmatprep.subr.mxu0 0.0
    %856 = vmatpush1.msra.mxu0 0.0
    %857 = vmatprep.subr.mxu0 0.0
    %858 = vmatpush1.msra.mxu0 0.0
    %859 = vmatprep.subr.mxu0 0.0
    %860 = vmatpush1.msra.mxu0 0.0
    %861 = vmatprep.subr.mxu0 0.0
    %862 = vmatpush1.msra.mxu0 0.0
    %863 = vmatprep.subr.mxu0 0.0
    %864 = vmatpush1.msra.mxu0 0.0
    %865 = vmatprep.subr.mxu0 0.0
    %866 = vmatpush1.msra.mxu0 0.0
    %867 = vmatprep.subr.mxu0 0.0
    %868 = vmatpush1.msra.mxu0 0.0
    %869 = vmatprep.subr.mxu0 0.0
    %870 = vmatpush1.msra.mxu0 0.0
    %871 = vmatprep.subr.mxu0 0.0
    %872 = vmatpush1.msra.mxu0 0.0
    %873 = vmatprep.mubr.f32.mxu0 0.0
    %874 = vmatmul.mubr.f32.gmra.mrb[0].mxu0 %v729
    %v875 = vpop.f32.mrb[0].mxu0
    %v876 = vadd.f32 %v747, %v875
    %v877 = vpop.f32.mrb[0].mxu0
    %878 = vmatprep.mubr.f32.mxu0 0.0
    %879 = vmatmul.mubr.f32.gmra.mrb[0].mxu0 %v730
    %v880 = vpop.f32.mrb[0].mxu0
    %v881 = vadd.f32 %v751, %v880
    %v882 = vpop.f32.mrb[0].mxu0
    %883 = vmatprep.mubr.f32.mxu0 0.0
    %884 = vmatmul.mubr.f32.gmra.mrb[0].mxu0 %v731
    %v885 = vpop.f32.mrb[0].mxu0
    %v886 = vadd.f32 %v755, %v885
    %v887 = vpop.f32.mrb[0].mxu0
    %888 = vmatprep.mubr.f32.mxu0 0.0
    %889 = vmatmul.mubr.f32.gmra.mrb[0].mxu0 %v732
    %v890 = vpop.f32.mrb[0].mxu0
    %v891 = vadd.f32 %v759, %v890
    %v892 = vpop.f32.mrb[0].mxu0
    %893 = vmatprep.mubr.f32.mxu0 0.0
    %894 = vmatmul.mubr.f32.gmra.mrb[0].mxu0 %v733
    %v895 = vpop.f32.mrb[0].mxu0
    %v896 = vadd.f32 %v763, %v895
    %v897 = vpop.f32.mrb[0].mxu0
    %898 = vmatprep.mubr.f32.mxu0 0.0
    %899 = vmatmul.mubr.f32.gmra.mrb[0].mxu0 %v734
    %v900 = vpop.f32.mrb[0].mxu0
    %v901 = vadd.f32 %v767, %v900
    %v902 = vpop.f32.mrb[0].mxu0
    %903 = vmatprep.mubr.f32.mxu0 0.0
    %904 = vmatmul.mubr.f32.gmra.mrb[0].mxu0 %v735
    %v905 = vpop.f32.mrb[0].mxu0
    %v906 = vadd.f32 %v771, %v905
    %v907 = vpop.f32.mrb[0].mxu0
    %908 = vmatprep.mubr.f32.mxu0 0.0
    %909 = vmatmul.mubr.f32.gmra.mrb[0].mxu0 %v736
    %v910 = vpop.f32.mrb[0].mxu0
    %v911 = vadd.f32 %v775, %v910
    %v912 = vpop.f32.mrb[0].mxu0
    %913 = vmatprep.mubr.f32.mxu0 0.0
    %914 = vmatmul.mubr.f32.gmra.mrb[0].mxu0 %v737
    %v915 = vpop.f32.mrb[0].mxu0
    %v916 = vadd.f32 %v779, %v915
    %v917 = vpop.f32.mrb[0].mxu0
    %918 = vmatprep.mubr.f32.mxu0 0.0
    %919 = vmatmul.mubr.f32.gmra.mrb[0].mxu0 %v738
    %v920 = vpop.f32.mrb[0].mxu0
    %v921 = vadd.f32 %v783, %v920
    %v922 = vpop.f32.mrb[0].mxu0
    %923 = vmatprep.mubr.f32.mxu0 0.0
    %924 = vmatmul.mubr.f32.gmra.mrb[0].mxu0 %v739
    %v925 = vpop.f32.mrb[0].mxu0
    %v926 = vadd.f32 %v787, %v925
    %v927 = vpop.f32.mrb[0].mxu0
    %928 = vmatprep.mubr.f32.mxu0 0.0
    %929 = vmatmul.mubr.f32.gmra.mrb[0].mxu0 %v740
    %v930 = vpop.f32.mrb[0].mxu0
    %v931 = vadd.f32 %v791, %v930
    %v932 = vpop.f32.mrb[0].mxu0
    %933 = vmatprep.mubr.f32.mxu0 0.0
    %934 = vmatmul.mubr.f32.gmra.mrb[0].mxu0 %v741
    %v935 = vpop.f32.mrb[0].mxu0
    %v936 = vadd.f32 %v795, %v935
    %v937 = vpop.f32.mrb[0].mxu0
    %938 = vmatprep.mubr.f32.mxu0 0.0
    %939 = vmatmul.mubr.f32.gmra.mrb[0].mxu0 %v742
    %v940 = vpop.f32.mrb[0].mxu0
    %v941 = vadd.f32 %v799, %v940
    %v942 = vpop.f32.mrb[0].mxu0
    %943 = vmatprep.mubr.f32.mxu0 0.0
    %944 = vmatmul.mubr.f32.gmra.mrb[0].mxu0 %v743
    %v945 = vpop.f32.mrb[0].mxu0
    %v946 = vadd.f32 %v803, %v945
    %v947 = vpop.f32.mrb[0].mxu0
    %948 = vmatprep.mubr.f32.mxu0 0.0
    %949 = vmatmul.mubr.f32.gmra.mrb[0].mxu0 %v744
    %v950 = vpop.f32.mrb[0].mxu0
    %v951 = vadd.f32 %v807, %v950
    %v952 = vpop.f32.mrb[0].mxu0
    %953 = vdwg.mxu0
    %v954 = vmax.f32 %v876, 0.0
    %v955 = vmax.f32 %v881, 0.0
    %v956 = vmax.f32 %v886, 0.0
    %v957 = vmax.f32 %v891, 0.0
    %v958 = vmax.f32 %v896, 0.0
    %v959 = vmax.f32 %v901, 0.0
    %v960 = vmax.f32 %v906, 0.0
    %v961 = vmax.f32 %v911, 0.0
    %v962 = vmax.f32 %v916, 0.0
    %v963 = vmax.f32 %v921, 0.0
    %v964 = vmax.f32 %v926, 0.0
    %v965 = vmax.f32 %v931, 0.0
    %v966 = vmax.f32 %v936, 0.0
    %v967 = vmax.f32 %v941, 0.0
    %v968 = vmax.f32 %v946, 0.0
    %v969 = vmax.f32 %v951, 0.0
    %970 = vset.pattern.permute.xlu0 5
    %971 = vperm.xlu0 %970, %v30
    %v972 = vpop.permute.xlu0 %971
    %974 = vset.pattern.permute.xlu0 5
    %975 = vperm.xlu0 %974, %v31
    %v976 = vpop.permute.xlu0 %975
    %978 = vset.pattern.permute.xlu0 5
    %979 = vperm.xlu0 %978, %v32
    %v980 = vpop.permute.xlu0 %979
    %982 = vset.pattern.permute.xlu0 5
    %983 = vperm.xlu0 %982, %v33
    %v984 = vpop.permute.xlu0 %983
    %986 = vset.pattern.permute.xlu0 5
    %987 = vperm.xlu0 %986, %v34
    %v988 = vpop.permute.xlu0 %987
    %990 = vset.pattern.permute.xlu0 5
    %991 = vperm.xlu0 %990, %v35
    %v992 = vpop.permute.xlu0 %991
    %994 = vset.pattern.permute.xlu0 5
    %995 = vperm.xlu0 %994, %v36
    %v996 = vpop.permute.xlu0 %995
    %998 = vset.pattern.permute.xlu0 5
    %999 = vperm.xlu0 %998, %v37
    %v1000 = vpop.permute.xlu0 %999
    %1002 = vset.pattern.permute.xlu0 5
    %1003 = vperm.xlu0 %1002, %v38
    %v1004 = vpop.permute.xlu0 %1003
    %1006 = vset.pattern.permute.xlu0 5
    %1007 = vperm.xlu0 %1006, %v39
    %v1008 = vpop.permute.xlu0 %1007
    %1010 = vset.pattern.permute.xlu0 5
    %1011 = vperm.xlu0 %1010, %v40
    %v1012 = vpop.permute.xlu0 %1011
    %1014 = vset.pattern.permute.xlu0 5
    %1015 = vperm.xlu0 %1014, %v41
    %v1016 = vpop.permute.xlu0 %1015
    %1018 = vset.pattern.permute.xlu0 5
    %1019 = vperm.xlu0 %1018, %v42
    %v1020 = vpop.permute.xlu0 %1019
    %1022 = vset.pattern.permute.xlu0 5
    %1023 = vperm.xlu0 %1022, %v43
    %v1024 = vpop.permute.xlu0 %1023
    %1026 = vset.pattern.permute.xlu0 5
    %1027 = vperm.xlu0 %1026, %v44
    %v1028 = vpop.permute.xlu0 %1027
    %1030 = vset.pattern.permute.xlu0 5
    %1031 = vperm.xlu0 %1030, %v45
    %v1032 = vpop.permute.xlu0 %1031
    %v1034 = vmul.f32 %v972, %v954
    %v1035 = vmul.f32 %v976, %v955
    %v1036 = vmul.f32 %v980, %v956
    %v1037 = vmul.f32 %v984, %v957
    %v1038 = vmul.f32 %v988, %v958
    %v1039 = vmul.f32 %v992, %v959
    %v1040 = vmul.f32 %v996, %v960
    %v1041 = vmul.f32 %v1000, %v961
    %v1042 = vmul.f32 %v1004, %v962
    %v1043 = vmul.f32 %v1008, %v963
    %v1044 = vmul.f32 %v1012, %v964
    %v1045 = vmul.f32 %v1016, %v965
    %v1046 = vmul.f32 %v1020, %v966
    %v1047 = vmul.f32 %v1024, %v967
    %v1048 = vmul.f32 %v1028, %v968
    %v1049 = vmul.f32 %v1032, %v969
    %v1050 = vadd.f32 %v1034, %v1035
    %v1051 = vadd.f32 %v1050, %v1036
    %v1052 = vadd.f32 %v1051, %v1037
    %v1053 = vadd.f32 %v1052, %v1038
    %v1054 = vadd.f32 %v1053, %v1039
    %v1055 = vadd.f32 %v1054, %v1040
    %v1056 = vadd.f32 %v1055, %v1041
    %v1057 = vadd.f32 %v1056, %v1042
    %v1058 = vadd.f32 %v1057, %v1043
    %v1059 = vadd.f32 %v1058, %v1044
    %v1060 = vadd.f32 %v1059, %v1045
    %v1061 = vadd.f32 %v1060, %v1046
    %v1062 = vadd.f32 %v1061, %v1047
    %v1063 = vadd.f32 %v1062, %v1048
    %v1064 = vadd.f32 %v1063, %v1049
    %v1065 = vrot.slane %v1064, 4
    %v1066 = vadd.f32 %v1064, %v1065
    %v1067 = vrot.slane %v1066, 2
    %v1068 = vadd.f32 %v1066, %v1067
    %v1069 = vrot.slane %v1068, 1
    %v1070 = vadd.f32 %v1068, %v1069
    %1072 = vset.pattern.permute.xlu0 6
    %1073 = vperm.xlu0 %1072, %v46
    %v1074 = vpop.permute.xlu0 %1073
    %v1076 = vadd.f32 %v1070, %v1074
    %1077 = vst [vmem:[#allocation5] sm:$0x1] %v1076
    // Predicated region
    $region18: #{tpu_custom_call.1} parent=1 // pred_check
      _
    $region19: #{tpu_custom_call.1} parent=1 // pred_check_branch
      %1079 = sbr.rel (0) target = $region21
    $region20: #{tpu_custom_call.1} parent=1 // pred_region
      %s1081 = ssub.s32 16, 16
      %1082 = vsyncadd [#allocation4], %s1081
      %s1084 = sshll.u32 [#allocation5], 4
      %s1085 = int_to_ptr.vmem [resolvable:$true] %s1084
      %1087 = dma.vmem_to_hbm [thread:$0]  %s1085, 16, %s3, [#allocation4]
    $region21: #{tpu_custom_call.1} parent=1 // pred_fallthru
      _
    // Predicated region
    $region22: #{tpu_custom_call.1} parent=1 // pred_check
      _
    $region23: #{tpu_custom_call.1} parent=1 // pred_check_branch
      %1089 = sbr.rel (0) target = $region25
    $region24: #{tpu_custom_call.1} parent=1 // pred_region
      %1090 = dma.done [#allocation4], 16
    $region25: #{tpu_custom_call.1} parent=1 // pred_fallthru
      _
    %1091 = vsyncpa [#allocation3], 1
    %1092 = vsyncpa [#allocation4], 1

</llo_original>
